<compile_context>
chip_gen: v7x
topology: tpu7x:2x2x1
jax: 0.10.0
libtpu: 0.0.40
codegen_flags: <defaults>
</compile_context>

<pallas_src>
import functools

import jax
import jax.numpy as jnp
from jax.experimental import pallas as pl
from jax.experimental.pallas import tpu as pltpu

_VMEM_BUDGET_BYTES = 22 * 1024 * 1024   # target working set used to size the tile
_VMEM_LIMIT_BYTES = 48 * 1024 * 1024    # explicit scoped-VMEM limit (v5e default is 16 MiB)


def _dc_ce_kernel(logits_ref, labels_ref, out_ref,
                  acc_tp, acc_ps, acc_oh, acc_ce, *,
                  num_classes, c_pad, tile_rows, tiles_per_chunk,
                  n_valid, needs_mask):
    C, TS = num_classes, tile_rows
    t = pl.program_id(2)

    # ---- reset accumulators at the start of each (batch, chunk) spatial sweep
    @pl.when(t == 0)
    def _():
        acc_tp[...] = jnp.zeros_like(acc_tp)
        acc_ps[...] = jnp.zeros_like(acc_ps)
        acc_oh[...] = jnp.zeros_like(acc_oh)
        acc_ce[...] = jnp.zeros_like(acc_ce)

    # ---- load tile, cast in-kernel (inputs stay narrow in HBM)
    x = logits_ref[0].astype(jnp.float32)        # (C, TS, 128)
    tgt = labels_ref[0, 0].astype(jnp.int32)     # (TS, 128)

    if needs_mask:
        # Only generated when the spatial extent is ragged w.r.t. the tiling.
        j = pl.program_id(1) * tiles_per_chunk + t
        row = jax.lax.broadcasted_iota(jnp.int32, (TS, 128), 0)
        lane = jax.lax.broadcasted_iota(jnp.int32, (TS, 128), 1)
        pix = (j * TS + row) * 128 + lane
        valid_b = pix < n_valid                  # (TS, 128) bool
        valid = valid_b.astype(jnp.float32)
        x = jnp.where(valid_b[None], x, 0.0)     # keep exp/softmax finite on pads

    # ---- channel softmax: channel is a leading dim -> pure VPU max/add over slabs
    m = jnp.max(x, axis=0)                       # (TS, 128)
    e = jnp.exp(x - m[None])                     # (C, TS, 128)
    s = jnp.sum(e, axis=0)                       # (TS, 128)
    p = e * pl.reciprocal(s, approx=True)[None]  # softmax probs (C, TS, 128)
    lse = m + jnp.log(s)                         # (TS, 128), for CE

    # ---- one-hot of integer labels along the (leading) channel axis
    cls = jax.lax.broadcasted_iota(jnp.int32, (C, TS, 128), 0)
    onehot = (tgt[None] == cls).astype(jnp.float32)
    if needs_mask:
        onehot = onehot * valid[None]
        p_for_ps = p * valid[None]
    else:
        p_for_ps = p

    # ---- deferred reductions: elementwise VPU accumulation into vreg-shaped scratch
    acc_tp[...] += p * onehot                    # per-class true positives
    acc_ps[...] += p_for_ps                      # per-class sum(p)  (tp + fp)
    acc_oh[...] += onehot                        # per-class sum(gt) (tp + fn)
    acc_ce[...] += onehot * (lse[None] - x)      # per-class -log softmax at target

    # ---- collapse to per-class / per-lane partial sums once per (batch, chunk)
    @pl.when(t == pl.num_programs(2) - 1)
    def _():
        out_ref[0, 0, 0 * c_pad:0 * c_pad + C, :] = jnp.sum(acc_tp[...], axis=1)
        out_ref[0, 0, 1 * c_pad:1 * c_pad + C, :] = jnp.sum(acc_ps[...], axis=1)
        out_ref[0, 0, 2 * c_pad:2 * c_pad + C, :] = jnp.sum(acc_oh[...], axis=1)
        out_ref[0, 0, 3 * c_pad:3 * c_pad + C, :] = jnp.sum(acc_ce[...], axis=1)


def dc_and_ce_loss(net_output, target, *, weight_ce=1.0, weight_dice=1.0,
                   smooth=1e-5, max_tile_rows=None):
    """net_output: (B, C, *spatial) float (f32/bf16); target: (B, 1, *spatial) ints.

    Labels may be int8/int32; they are cast in-kernel (int8 halves label HBM traffic).
    """
    B, C = net_output.shape[:2]
    spatial = net_output.shape[2:]
    assert target.shape == (B, 1) + tuple(spatial)
    assert C >= 2, "need background + at least one foreground class"
    N = 1
    for d in spatial:
        N *= int(d)

    logits = net_output.reshape(B, C, N)
    labels = target.reshape(B, 1, N)

    # Pad flattened spatial axis to a multiple of 128 lanes (copy only if needed;
    # nnU-Net patch sizes are essentially always 128-divisible so this is free).
    n_pad = (-N) % 128
    if n_pad:
        logits = jnp.pad(logits, ((0, 0), (0, 0), (0, n_pad)))
        labels = jnp.pad(labels, ((0, 0), (0, 0), (0, n_pad)))
    NR = (N + n_pad) // 128
    logits4 = logits.reshape(B, C, NR, 128)
    labels4 = labels.reshape(B, 1, NR, 128)

    # ---- adaptive spatial tile (rows of 128 lanes), sized against a VMEM budget:
    #      2x double-buffered inputs + 4 per-class f32 accumulators + f32 temporaries.
    lb = jnp.dtype(net_output.dtype).itemsize
    tb = jnp.dtype(target.dtype).itemsize
    row_bytes = (2 * 128 * (C * lb + tb)          # double-buffered input DMA
                 + 4 * C * 128 * 4                # tp/ps/oh/ce accumulators
                 + (8 * C + 8) * 128 * 4)         # pessimistic f32 temporaries
    TS = max(8, (int(_VMEM_BUDGET_BYTES) // row_bytes) // 8 * 8)
    if max_tile_rows is not None:
        TS = min(TS, max(8, (int(max_tile_rows) // 8) * 8))
    if NR <= TS:
        TS = NR                                   # single tile: block == full extent
    num_tiles = pl.cdiv(NR, TS)

    # ---- v7x megacore: no batch parallelism -> split the spatial sweep into two
    #      "parallel" chunks (only when the tile count divides evenly; raw per-chunk
    #      sums are combined in the wrapper so dice stays exact).
    num_chunks = 1
    if B == 1 and num_tiles >= 2 and TS >= 8:
        ts_try = TS
        for _ in range(16):
            if ts_try < 8:
                break
            if pl.cdiv(NR, ts_try) % 2 == 0:
                break
            ts_try -= 8
        if ts_try >= 8 and pl.cdiv(NR, ts_try) % 2 == 0:
            TS = ts_try
            num_tiles = pl.cdiv(NR, TS)
            num_chunks = 2
    tpc = num_tiles // num_chunks

    needs_mask = (num_tiles * TS * 128) != N
    Cr8 = ((C + 7) // 8) * 8                      # 8-aligned per-quantity row group

    kernel = functools.partial(
        _dc_ce_kernel,
        num_classes=C, c_pad=Cr8, tile_rows=TS, tiles_per_chunk=tpc,
        n_valid=N, needs_mask=needs_mask,
    )

    def tile_map(b, c, t):
        return (b, 0, c * tpc + t, 0)

    out_rows = 4 * Cr8
    cost = pl.CostEstimate(
        flops=int(16 * B * C * NR * 128),
        transcendentals=int(B * NR * 128 * (C + 2)),
        bytes_accessed=int(logits4.size * lb + labels4.size * tb
                           + B * num_chunks * out_rows * 128 * 4),
    )

    stats = pl.pallas_call(
        kernel,
        out_shape=jax.ShapeDtypeStruct((B, num_chunks, out_rows, 128), jnp.float32),
        grid=(B, num_chunks, tpc),
        in_specs=[
            pl.BlockSpec((1, C, TS, 128), tile_map),
            pl.BlockSpec((1, 1, TS, 128), tile_map),
        ],
        out_specs=pl.BlockSpec((1, 1, out_rows, 128), lambda b, c, t: (b, c, 0, 0)),
        scratch_shapes=[
            pltpu.VMEM((C, TS, 128), jnp.float32),   # tp accumulator
            pltpu.VMEM((C, TS, 128), jnp.float32),   # sum(p) accumulator
            pltpu.VMEM((C, TS, 128), jnp.float32),   # sum(onehot) accumulator
            pltpu.VMEM((C, TS, 128), jnp.float32),   # CE accumulator
        ],
        compiler_params=pltpu.CompilerParams(
            dimension_semantics=("parallel", "parallel", "arbitrary"),
            vmem_limit_bytes=_VMEM_LIMIT_BYTES,
        ),
        cost_estimate=cost,
    )(logits4, labels4)

    # ---- tiny finalization in plain JAX: combine chunks / lanes, compute CE + dice.
    tp = jnp.sum(stats[:, :, 0 * Cr8:0 * Cr8 + C, :], axis=(1, 3))    # (B, C)
    ps = jnp.sum(stats[:, :, 1 * Cr8:1 * Cr8 + C, :], axis=(1, 3))    # (B, C)
    oh = jnp.sum(stats[:, :, 2 * Cr8:2 * Cr8 + C, :], axis=(1, 3))    # (B, C)
    ce_sum = jnp.sum(stats[:, :, 3 * Cr8:3 * Cr8 + C, :], axis=(1, 2, 3))  # (B,)

    ce_loss = jnp.sum(ce_sum) / (B * N)
    fp = ps - tp
    fn = oh - tp
    dc = (2.0 * tp + smooth) / jnp.maximum(2.0 * tp + fp + fn + smooth, 1e-8)
    dc_loss = -jnp.mean(dc[:, 1:])               # do_bg=False
    return weight_ce * ce_loss + weight_dice * dc_loss


def _reference_loss(net_output, target, weight_ce=1.0, weight_dice=1.0, smooth=1e-5):
    """Pure-JAX reference mirroring the PyTorch module (sanity check)."""
    B, C = net_output.shape[:2]
    n_pix = 1
    for d in net_output.shape[2:]:
        n_pix *= int(d)
    x = net_output.astype(jnp.float32)
    lab = target[:, 0].astype(jnp.int32)
    log_sm = jax.nn.log_softmax(x, axis=1)
    onehot = jax.nn.one_hot(lab, C, axis=1, dtype=jnp.float32)
    ce = -jnp.sum(onehot * log_sm) / (B * n_pix)
    p = jax.nn.softmax(x, axis=1)
    axes = tuple(range(2, net_output.ndim))
    tp = jnp.sum(p * onehot, axis=axes)
    fp = jnp.sum(p * (1.0 - onehot), axis=axes)
    fn = jnp.sum((1.0 - p) * onehot, axis=axes)
    dc = (2 * tp + smooth) / jnp.maximum(2 * tp + fp + fn + smooth, 1e-8)
    dc_loss = -jnp.mean(dc[:, 1:])
    return weight_ce * ce + weight_dice * dc_loss


if __name__ == "__main__":
    key = jax.random.PRNGKey(0)
    k1, k2, k3, k4, k5, k6 = jax.random.split(key, 6)

    # Test 1: main path (128-divisible spatial extent, no masking, no chunking).
    B, C, H, W = 2, 4, 16, 16
    net_output = jax.random.normal(k1, (B, C, H, W), dtype=jnp.float32)
    target = jax.random.randint(k2, (B, 1, H, W), 0, C, dtype=jnp.int32)
    loss = jax.block_until_ready(dc_and_ce_loss(net_output, target))
    ref = _reference_loss(net_output, target)
    assert jnp.allclose(loss, ref, rtol=1e-3, atol=1e-3), (loss, ref)

    # Test 2: ragged spatial extent -> wrapper pad + in-kernel validity mask.
    B2, C2, H2, W2 = 2, 4, 20, 20
    net_output2 = jax.random.normal(k3, (B2, C2, H2, W2), dtype=jnp.float32)
    target2 = jax.random.randint(k4, (B2, 1, H2, W2), 0, C2, dtype=jnp.int32)
    loss2 = jax.block_until_ready(dc_and_ce_loss(net_output2, target2))
    ref2 = _reference_loss(net_output2, target2)
    assert jnp.allclose(loss2, ref2, rtol=1e-3, atol=1e-3), (loss2, ref2)

    # Test 3: B == 1 -> spatial sweep split into two parallel chunks (v7x megacore);
    # bf16 logits + int8 labels exercise the in-kernel casts / narrow-label path.
    B3, C3, H3, W3 = 1, 4, 64, 64
    net_output3 = jax.random.normal(
        k5, (B3, C3, H3, W3), dtype=jnp.float32).astype(jnp.bfloat16)
    target3 = jax.random.randint(
        k6, (B3, 1, H3, W3), 0, C3, dtype=jnp.int32).astype(jnp.int8)
    loss3 = jax.block_until_ready(dc_and_ce_loss(net_output3, target3, max_tile_rows=8))
    ref3 = _reference_loss(net_output3, target3)
    assert jnp.allclose(loss3, ref3, rtol=2e-3, atol=2e-3), (loss3, ref3)

    print("KERNEL_OK")
</pallas_src>

<mosaic_0001>
module attributes {stable_mosaic.version = 11 : i64} {
  func.func @_dc_ce_kernel(%arg0: i32, %arg1: i32, %arg2: i32, %arg3: memref<1x4x2x128xf32, #tpu.memory_space<vmem>>, %arg4: memref<1x1x2x128xi32, #tpu.memory_space<vmem>>, %arg5: memref<1x1x32x128xf32, #tpu.memory_space<vmem>>, %arg6: memref<4x2x128xf32, #tpu.memory_space<vmem>>, %arg7: memref<4x2x128xf32, #tpu.memory_space<vmem>>, %arg8: memref<4x2x128xf32, #tpu.memory_space<vmem>>, %arg9: memref<4x2x128xf32, #tpu.memory_space<vmem>>) attributes {dimension_semantics = [#tpu.dimension_semantics<parallel>, #tpu.dimension_semantics<parallel>, #tpu.dimension_semantics<arbitrary>], iteration_bounds = array<i64: 2, 1, 1>, scalar_prefetch = 0 : i64, scratch_operands = 4 : i64, tpu.core_type = #tpu.core_type<tc>, window_params = [{transform_indices = @transform_0, window_bounds = array<i64: 1, 4, 2, 128>}, {transform_indices = @transform_1, window_bounds = array<i64: 1, 1, 2, 128>}, {transform_indices = @transform_2, window_bounds = array<i64: 1, 1, 32, 128>}]} {
    %c0_i32 = arith.constant 0 : i32
    %0 = arith.cmpi eq, %arg2, %c0_i32 : i32
    %1 = arith.extui %0 : i1 to i32
    %c0_i32_0 = arith.constant 0 : i32
    %2 = arith.cmpi ne, %1, %c0_i32_0 : i32
    scf.if %2 {
      %cst_35 = arith.constant 0.000000e+00 : f32
      %45 = vector.broadcast %cst_35 : f32 to vector<4x2x128xf32>
      %c0_36 = arith.constant 0 : index
      %c0_37 = arith.constant 0 : index
      %c0_38 = arith.constant 0 : index
      %46 = vector.load %arg6[%c0_36, %c0_37, %c0_38] : memref<4x2x128xf32, #tpu.memory_space<vmem>>, vector<4x2x128xf32>
      tpu.vector_store %arg6[%c0_36, %c0_37, %c0_38], %45 {strides = array<i32>} : memref<4x2x128xf32, #tpu.memory_space<vmem>>, vector<4x2x128xf32>,
      %cst_39 = arith.constant 0.000000e+00 : f32
      %47 = vector.broadcast %cst_39 : f32 to vector<4x2x128xf32>
      %c0_40 = arith.constant 0 : index
      %c0_41 = arith.constant 0 : index
      %c0_42 = arith.constant 0 : index
      %48 = vector.load %arg7[%c0_40, %c0_41, %c0_42] : memref<4x2x128xf32, #tpu.memory_space<vmem>>, vector<4x2x128xf32>
      tpu.vector_store %arg7[%c0_40, %c0_41, %c0_42], %47 {strides = array<i32>} : memref<4x2x128xf32, #tpu.memory_space<vmem>>, vector<4x2x128xf32>,
      %cst_43 = arith.constant 0.000000e+00 : f32
      %49 = vector.broadcast %cst_43 : f32 to vector<4x2x128xf32>
      %c0_44 = arith.constant 0 : index
      %c0_45 = arith.constant 0 : index
      %c0_46 = arith.constant 0 : index
      %50 = vector.load %arg8[%c0_44, %c0_45, %c0_46] : memref<4x2x128xf32, #tpu.memory_space<vmem>>, vector<4x2x128xf32>
      tpu.vector_store %arg8[%c0_44, %c0_45, %c0_46], %49 {strides = array<i32>} : memref<4x2x128xf32, #tpu.memory_space<vmem>>, vector<4x2x128xf32>,
      %cst_47 = arith.constant 0.000000e+00 : f32
      %51 = vector.broadcast %cst_47 : f32 to vector<4x2x128xf32>
      %c0_48 = arith.constant 0 : index
      %c0_49 = arith.constant 0 : index
      %c0_50 = arith.constant 0 : index
      %52 = vector.load %arg9[%c0_48, %c0_49, %c0_50] : memref<4x2x128xf32, #tpu.memory_space<vmem>>, vector<4x2x128xf32>
      tpu.vector_store %arg9[%c0_48, %c0_49, %c0_50], %51 {strides = array<i32>} : memref<4x2x128xf32, #tpu.memory_space<vmem>>, vector<4x2x128xf32>,
    } else {
    }
    %c0 = arith.constant 0 : index
    %c0_1 = arith.constant 0 : index
    %c0_2 = arith.constant 0 : index
    %c0_3 = arith.constant 0 : index
    %3 = vector.load %arg3[%c0, %c0_1, %c0_2, %c0_3] : memref<1x4x2x128xf32, #tpu.memory_space<vmem>>, vector<1x4x2x128xf32>
    %4 = vector.shape_cast %3 : vector<1x4x2x128xf32> to vector<4x2x128xf32>
    %c0_4 = arith.constant 0 : index
    %c0_5 = arith.constant 0 : index
    %c0_6 = arith.constant 0 : index
    %c0_7 = arith.constant 0 : index
    %5 = vector.load %arg4[%c0_4, %c0_5, %c0_6, %c0_7] : memref<1x1x2x128xi32, #tpu.memory_space<vmem>>, vector<1x1x2x128xi32>
    %6 = vector.shape_cast %5 : vector<1x1x2x128xi32> to vector<2x128xi32>
    %cst = arith.constant dense<0xFF800000> : vector<2x128xf32>
    %7 = vector.multi_reduction <maximumf>, %4, %cst [0] : vector<4x2x128xf32> to vector<2x128xf32>
    %8 = vector.shape_cast %7 : vector<2x128xf32> to vector<1x2x128xf32>
    %9 = vector.broadcast %8 : vector<1x2x128xf32> to vector<4x2x128xf32>
    %10 = arith.subf %4, %9 : vector<4x2x128xf32>
    %11 = math.exp %10 : vector<4x2x128xf32>
    %cst_8 = arith.constant dense<0.000000e+00> : vector<2x128xf32>
    %12 = vector.multi_reduction <add>, %11, %cst_8 [0] : vector<4x2x128xf32> to vector<2x128xf32>
    %13 = tpu.reciprocal %12 {approx = true} : vector<2x128xf32> -> vector<2x128xf32>
    %14 = vector.shape_cast %13 : vector<2x128xf32> to vector<1x2x128xf32>
    %15 = vector.broadcast %14 : vector<1x2x128xf32> to vector<4x2x128xf32>
    %16 = arith.mulf %11, %15 : vector<4x2x128xf32>
    %17 = math.log %12 : vector<2x128xf32>
    %18 = arith.addf %7, %17 : vector<2x128xf32>
    %19 = tpu.iota {dimensions = array<i32: 0>} : vector<4x2x128xi32>
    %20 = vector.shape_cast %6 : vector<2x128xi32> to vector<1x2x128xi32>
    %21 = vector.broadcast %20 : vector<1x2x128xi32> to vector<4x2x128xi32>
    %22 = arith.cmpi eq, %21, %19 : vector<4x2x128xi32>
    %23 = arith.extui %22 : vector<4x2x128xi1> to vector<4x2x128xi32>
    %24 = arith.sitofp %23 : vector<4x2x128xi32> to vector<4x2x128xf32>
    %c0_9 = arith.constant 0 : index
    %c0_10 = arith.constant 0 : index
    %c0_11 = arith.constant 0 : index
    %25 = vector.load %arg6[%c0_9, %c0_10, %c0_11] : memref<4x2x128xf32, #tpu.memory_space<vmem>>, vector<4x2x128xf32>
    %26 = arith.mulf %16, %24 : vector<4x2x128xf32>
    %27 = arith.addf %25, %26 : vector<4x2x128xf32>
    %c0_12 = arith.constant 0 : index
    %c0_13 = arith.constant 0 : index
    %c0_14 = arith.constant 0 : index
    %28 = vector.load %arg6[%c0_12, %c0_13, %c0_14] : memref<4x2x128xf32, #tpu.memory_space<vmem>>, vector<4x2x128xf32>
    tpu.vector_store %arg6[%c0_12, %c0_13, %c0_14], %27 {strides = array<i32>} : memref<4x2x128xf32, #tpu.memory_space<vmem>>, vector<4x2x128xf32>,
    %c0_15 = arith.constant 0 : index
    %c0_16 = arith.constant 0 : index
    %c0_17 = arith.constant 0 : index
    %29 = vector.load %arg7[%c0_15, %c0_16, %c0_17] : memref<4x2x128xf32, #tpu.memory_space<vmem>>, vector<4x2x128xf32>
    %30 = arith.addf %29, %16 : vector<4x2x128xf32>
    %c0_18 = arith.constant 0 : index
    %c0_19 = arith.constant 0 : index
    %c0_20 = arith.constant 0 : index
    %31 = vector.load %arg7[%c0_18, %c0_19, %c0_20] : memref<4x2x128xf32, #tpu.memory_space<vmem>>, vector<4x2x128xf32>
    tpu.vector_store %arg7[%c0_18, %c0_19, %c0_20], %30 {strides = array<i32>} : memref<4x2x128xf32, #tpu.memory_space<vmem>>, vector<4x2x128xf32>,
    %c0_21 = arith.constant 0 : index
    %c0_22 = arith.constant 0 : index
    %c0_23 = arith.constant 0 : index
    %32 = vector.load %arg8[%c0_21, %c0_22, %c0_23] : memref<4x2x128xf32, #tpu.memory_space<vmem>>, vector<4x2x128xf32>
    %33 = arith.addf %32, %24 : vector<4x2x128xf32>
    %c0_24 = arith.constant 0 : index
    %c0_25 = arith.constant 0 : index
    %c0_26 = arith.constant 0 : index
    %34 = vector.load %arg8[%c0_24, %c0_25, %c0_26] : memref<4x2x128xf32, #tpu.memory_space<vmem>>, vector<4x2x128xf32>
    tpu.vector_store %arg8[%c0_24, %c0_25, %c0_26], %33 {strides = array<i32>} : memref<4x2x128xf32, #tpu.memory_space<vmem>>, vector<4x2x128xf32>,
    %c0_27 = arith.constant 0 : index
    %c0_28 = arith.constant 0 : index
    %c0_29 = arith.constant 0 : index
    %35 = vector.load %arg9[%c0_27, %c0_28, %c0_29] : memref<4x2x128xf32, #tpu.memory_space<vmem>>, vector<4x2x128xf32>
    %36 = vector.shape_cast %18 : vector<2x128xf32> to vector<1x2x128xf32>
    %37 = vector.broadcast %36 : vector<1x2x128xf32> to vector<4x2x128xf32>
    %38 = arith.subf %37, %4 : vector<4x2x128xf32>
    %39 = arith.mulf %24, %38 : vector<4x2x128xf32>
    %40 = arith.addf %35, %39 : vector<4x2x128xf32>
    %c0_30 = arith.constant 0 : index
    %c0_31 = arith.constant 0 : index
    %c0_32 = arith.constant 0 : index
    %41 = vector.load %arg9[%c0_30, %c0_31, %c0_32] : memref<4x2x128xf32, #tpu.memory_space<vmem>>, vector<4x2x128xf32>
    tpu.vector_store %arg9[%c0_30, %c0_31, %c0_32], %40 {strides = array<i32>} : memref<4x2x128xf32, #tpu.memory_space<vmem>>, vector<4x2x128xf32>,
    %c0_i32_33 = arith.constant 0 : i32
    %42 = arith.cmpi eq, %arg2, %c0_i32_33 : i32
    %43 = arith.extui %42 : i1 to i32
    %c0_i32_34 = arith.constant 0 : i32
    %44 = arith.cmpi ne, %43, %c0_i32_34 : i32
    scf.if %44 {
      %c0_35 = arith.constant 0 : index
      %c0_36 = arith.constant 0 : index
      %c0_37 = arith.constant 0 : index
      %45 = vector.load %arg6[%c0_35, %c0_36, %c0_37] : memref<4x2x128xf32, #tpu.memory_space<vmem>>, vector<4x2x128xf32>
      %cst_38 = arith.constant dense<0.000000e+00> : vector<4x128xf32>
      %46 = vector.multi_reduction <add>, %45, %cst_38 [1] : vector<4x2x128xf32> to vector<4x128xf32>
      %c0_39 = arith.constant 0 : index
      %c0_40 = arith.constant 0 : index
      %c0_41 = arith.constant 0 : index
      %c0_42 = arith.constant 0 : index
      %47 = vector.load %arg5[%c0_39, %c0_40, %c0_41, %c0_42] : memref<1x1x32x128xf32, #tpu.memory_space<vmem>>, vector<1x1x4x128xf32>
      %48 = vector.shape_cast %47 : vector<1x1x4x128xf32> to vector<4x128xf32>
      %49 = vector.shape_cast %46 : vector<4x128xf32> to vector<1x1x4x128xf32>
      tpu.vector_store %arg5[%c0_39, %c0_40, %c0_41, %c0_42], %49 {strides = array<i32>} : memref<1x1x32x128xf32, #tpu.memory_space<vmem>>, vector<1x1x4x128xf32>,
      %c0_43 = arith.constant 0 : index
      %c0_44 = arith.constant 0 : index
      %c0_45 = arith.constant 0 : index
      %50 = vector.load %arg7[%c0_43, %c0_44, %c0_45] : memref<4x2x128xf32, #tpu.memory_space<vmem>>, vector<4x2x128xf32>
      %cst_46 = arith.constant dense<0.000000e+00> : vector<4x128xf32>
      %51 = vector.multi_reduction <add>, %50, %cst_46 [1] : vector<4x2x128xf32> to vector<4x128xf32>
      %c0_47 = arith.constant 0 : index
      %c0_48 = arith.constant 0 : index
      %c8 = arith.constant 8 : index
      %c0_49 = arith.constant 0 : index
      %52 = vector.load %arg5[%c0_47, %c0_48, %c8, %c0_49] : memref<1x1x32x128xf32, #tpu.memory_space<vmem>>, vector<1x1x4x128xf32>
      %53 = vector.shape_cast %52 : vector<1x1x4x128xf32> to vector<4x128xf32>
      %54 = vector.shape_cast %51 : vector<4x128xf32> to vector<1x1x4x128xf32>
      tpu.vector_store %arg5[%c0_47, %c0_48, %c8, %c0_49], %54 {strides = array<i32>} : memref<1x1x32x128xf32, #tpu.memory_space<vmem>>, vector<1x1x4x128xf32>,
      %c0_50 = arith.constant 0 : index
      %c0_51 = arith.constant 0 : index
      %c0_52 = arith.constant 0 : index
      %55 = vector.load %arg8[%c0_50, %c0_51, %c0_52] : memref<4x2x128xf32, #tpu.memory_space<vmem>>, vector<4x2x128xf32>
      %cst_53 = arith.constant dense<0.000000e+00> : vector<4x128xf32>
      %56 = vector.multi_reduction <add>, %55, %cst_53 [1] : vector<4x2x128xf32> to vector<4x128xf32>
      %c0_54 = arith.constant 0 : index
      %c0_55 = arith.constant 0 : index
      %c16 = arith.constant 16 : index
      %c0_56 = arith.constant 0 : index
      %57 = vector.load %arg5[%c0_54, %c0_55, %c16, %c0_56] : memref<1x1x32x128xf32, #tpu.memory_space<vmem>>, vector<1x1x4x128xf32>
      %58 = vector.shape_cast %57 : vector<1x1x4x128xf32> to vector<4x128xf32>
      %59 = vector.shape_cast %56 : vector<4x128xf32> to vector<1x1x4x128xf32>
      tpu.vector_store %arg5[%c0_54, %c0_55, %c16, %c0_56], %59 {strides = array<i32>} : memref<1x1x32x128xf32, #tpu.memory_space<vmem>>, vector<1x1x4x128xf32>,
      %c0_57 = arith.constant 0 : index
      %c0_58 = arith.constant 0 : index
      %c0_59 = arith.constant 0 : index
      %60 = vector.load %arg9[%c0_57, %c0_58, %c0_59] : memref<4x2x128xf32, #tpu.memory_space<vmem>>, vector<4x2x128xf32>
      %cst_60 = arith.constant dense<0.000000e+00> : vector<4x128xf32>
      %61 = vector.multi_reduction <add>, %60, %cst_60 [1] : vector<4x2x128xf32> to vector<4x128xf32>
      %c0_61 = arith.constant 0 : index
      %c0_62 = arith.constant 0 : index
      %c24 = arith.constant 24 : index
      %c0_63 = arith.constant 0 : index
      %62 = vector.load %arg5[%c0_61, %c0_62, %c24, %c0_63] : memref<1x1x32x128xf32, #tpu.memory_space<vmem>>, vector<1x1x4x128xf32>
      %63 = vector.shape_cast %62 : vector<1x1x4x128xf32> to vector<4x128xf32>
      %64 = vector.shape_cast %61 : vector<4x128xf32> to vector<1x1x4x128xf32>
      tpu.vector_store %arg5[%c0_61, %c0_62, %c24, %c0_63], %64 {strides = array<i32>} : memref<1x1x32x128xf32, #tpu.memory_space<vmem>>, vector<1x1x4x128xf32>,
    } else {
    }
    return
  }
  func.func @transform_0(%arg0: i32, %arg1: i32, %arg2: i32) -> (i32, i32, i32, i32) {
    %c1_i32 = arith.constant 1 : i32
    %0 = arith.muli %arg1, %c1_i32 : i32
    %1 = arith.addi %0, %arg2 : i32
    %c0_i32 = arith.constant 0 : i32
    %c0_i32_0 = arith.constant 0 : i32
    %c0_i32_1 = arith.constant 0 : i32
    return %arg0, %c0_i32, %1, %c0_i32_0 : i32, i32, i32, i32
  }
  func.func @transform_1(%arg0: i32, %arg1: i32, %arg2: i32) -> (i32, i32, i32, i32) {
    %c1_i32 = arith.constant 1 : i32
    %0 = arith.muli %arg1, %c1_i32 : i32
    %1 = arith.addi %0, %arg2 : i32
    %c0_i32 = arith.constant 0 : i32
    %c0_i32_0 = arith.constant 0 : i32
    %c0_i32_1 = arith.constant 0 : i32
    return %arg0, %c0_i32, %1, %c0_i32_0 : i32, i32, i32, i32
  }
  func.func @transform_2(%arg0: i32, %arg1: i32, %arg2: i32) -> (i32, i32, i32, i32) {
    %c0_i32 = arith.constant 0 : i32
    %c0_i32_0 = arith.constant 0 : i32
    %c0_i32_1 = arith.constant 0 : i32
    return %arg0, %arg1, %c0_i32, %c0_i32_0 : i32, i32, i32, i32
  }
}

</mosaic_0001>

<llo_original>
// kernel: tpu_custom_call.1
$region0: #{tpu_custom_call.1}
  #allocation0 [shape = 'u32[]', space=smem, size = 0x4, offset = 0x4, fixed_abs, tag = 'smem constant byte address 0x4 - core index']
  #allocation1 [shape = 'u32[144,128]{1,0:T(1,128)}', space=vmem, size = 0x12000, scoped, tag = 'internal scratch']
  #allocation2 [shape = 'f32[4,2,128]{2,1,0:T(2,128)}', space=vmem, size = 0x1000, scoped, tag = 'scratch operand']
  #allocation3 [shape = 'f32[4,2,128]{2,1,0:T(2,128)}', space=vmem, size = 0x1000, scoped, tag = 'scratch operand']
  #allocation4 [shape = 'f32[4,2,128]{2,1,0:T(2,128)}', space=vmem, size = 0x1000, scoped, tag = 'scratch operand']
  #allocation5 [shape = 'f32[4,2,128]{2,1,0:T(2,128)}', space=vmem, size = 0x1000, scoped, tag = 'scratch operand']
  %s0 = inlined_call_operand.hbm [shape: f32[2,4,2,128], index: 0, kind: input, shape index: {}]
  %s1 = inlined_call_operand.hbm [shape: s32[2,1,2,128], index: 1, kind: input, shape index: {}]
  %s2 = inlined_call_operand.hbm [shape: f32[2,1,32,128], index: 2, kind: output, shape index: {}]
  %s3 = sld [smem:[#allocation0]]
  $region57: #{tpu_custom_call.1} parent=0
    _
  %s5 = ssub.s32 1, %s3
  %s6 = scalar_select 0, %s5, %s3
  $region1: #{tpu_custom_call.1} parent=0
    #allocation6 [shape = 'u8[8192]{0}', space=vmem, size = 0x2000, scoped, tag = 'input window, operand 0']
    #allocation7 [shape = 's32[2]{0}', space=sflag, size = 0x8, scoped, tag = 'scoped memory for tpu_custom_call.1']
    #allocation8 [shape = 's32[2]{0}', space=sflag, size = 0x8, scoped, tag = 'scoped memory for tpu_custom_call.1']
    #allocation9 [shape = 'u8[2048]{0}', space=vmem, size = 0x800, scoped, tag = 'input window, operand 1']
    #allocation10 [shape = 's32[2]{0}', space=sflag, size = 0x8, scoped, tag = 'scoped memory for tpu_custom_call.1']
    #allocation11 [shape = 'u8[32768]{0}', space=vmem, size = 0x8000, scoped, tag = 'output window, operand 0']
    %7 = vsyncpa [#allocation7], 0
    %s8 = scalar_lea.sflag [#allocation7], 1
    %9 = vsyncpa %s8, 0
    %10 = vsyncpa [#allocation10], 0
    %s11 = scalar_lea.sflag [#allocation10], 1
    %12 = vsyncpa %s11, 0
    %13 = vsyncpa [#allocation8], 0
    %s14 = scalar_lea.sflag [#allocation8], 1
    %15 = vsyncpa %s14, 0
    loop: start=0, step=1, limit=4
    $region2: #{tpu_custom_call.1} parent=1 // loop_pre_header
      _
    $region3: #{tpu_custom_call.1} parent=1 // loop_header
      %s17 = sphi 0, %s21
      %p18 = scmp.ge.s32.totalorder %s17, 4
      %s24 = sphi 0, %s43
      %s25 = sphi 0, %s39
      %s26 = sphi 0, %s35
      %s27 = sphi 0, %s24
      %s28 = sphi 0, %s25
      %s29 = sphi 0, %s26
      %s30 = sphi 0, %s27
      %s31 = sphi 0, %s28
      %s32 = sphi 0, %s29
      %s50 = sphi 0, %s52
      %s53 = sphi 0, %s50
      %s54 = sphi 0, %s53
      %s70 = sphi 0, %s54
      %s80 = sphi 0, %s82
      %s83 = sphi 0, %s80
      %s84 = sphi 0, %s83
      %s100 = sphi 0, %s84
      %s108 = sphi 0, %s110
      %s111 = sphi 0, %s108
      %s112 = sphi 0, %s111
      %s128 = sphi 0, %s112
    $region4: #{tpu_custom_call.1} parent=1 // loop_header_branch
      %20 = sbr.rel (%p18) target = $region8
    $region5: #{tpu_custom_call.1} parent=1 // loop_body
      %s22 = ssub.s32 %s17, 1
      %s23 = ssub.s32 %s17, 2
      %s33 = sadd.s32 1, %s26
      %p34 = scmp.ge.s32.totalorder %s33, 1
      %s35 = scalar_select %p34, 0, %s33
      %s36 = sadd.s32 1, %s25
      %s37 = scalar_select %p34, %s36, %s25
      %p38 = scmp.ge.s32.totalorder %s37, 1
      %s39 = scalar_select %p38, 0, %s37
      %s40 = sadd.s32 1, %s24
      %s41 = scalar_select %p38, %s40, %s24
      %p42 = scmp.ge.s32.totalorder %s41, 2
      %s43 = scalar_select %p42, 0, %s41
      %s44 = sadd.s32 %s25, %s26
      %s45 = sadd.s32 %s39, %s35
      %s46 = ssub.s32 %s24, %s43
      %s47 = ssub.s32 %s44, %s45
      %s48 = sor.u32 %s46, %s47
      %p49 = scmp.eq.s32.totalorder %s48, 0
      %s51 = sadd.s32 %s50, 1
      %s52 = scalar_select %p49, %s50, %s51
      %p55 = pneg %p49
      %p56 = scmp.eq.s32.totalorder %s17, 1
      %p57 = por %p55, %p56
      %p58 = scmp.ne.s32.totalorder %s50, %s53
      %p59 = scmp.eq.s32.totalorder %s17, 0
      %p60 = por %p58, %p59
      %p61 = scmp.ne.s32.totalorder %s50, %s53
      %p62 = scmp.eq.s32.totalorder %s22, 1
      %p63 = por %p61, %p62
      %p64 = scmp.ne.s32.totalorder %s53, %s54
      %p65 = scmp.eq.s32.totalorder %s22, 0
      %p66 = por %p64, %p65
      %p67 = scmp.ne.s32.totalorder %s53, %s54
      %p68 = scmp.eq.s32.totalorder %s23, 1
      %p69 = por %p67, %p68
      %p71 = scmp.ne.s32.totalorder %s54, %s70
      %p72 = scmp.eq.s32.totalorder %s23, 0
      %p73 = por %p71, %p72
      %s74 = sadd.s32 %s25, %s26
      %s75 = sadd.s32 %s39, %s35
      %s76 = ssub.s32 %s24, %s43
      %s77 = ssub.s32 %s74, %s75
      %s78 = sor.u32 %s76, %s77
      %p79 = scmp.eq.s32.totalorder %s78, 0
      %s81 = sadd.s32 %s80, 1
      %s82 = scalar_select %p79, %s80, %s81
      %p85 = pneg %p79
      %p86 = scmp.eq.s32.totalorder %s17, 1
      %p87 = por %p85, %p86
      %p88 = scmp.ne.s32.totalorder %s80, %s83
      %p89 = scmp.eq.s32.totalorder %s17, 0
      %p90 = por %p88, %p89
      %p91 = scmp.ne.s32.totalorder %s80, %s83
      %p92 = scmp.eq.s32.totalorder %s22, 1
      %p93 = por %p91, %p92
      %p94 = scmp.ne.s32.totalorder %s83, %s84
      %p95 = scmp.eq.s32.totalorder %s22, 0
      %p96 = por %p94, %p95
      %p97 = scmp.ne.s32.totalorder %s83, %s84
      %p98 = scmp.eq.s32.totalorder %s23, 1
      %p99 = por %p97, %p98
      %p101 = scmp.ne.s32.totalorder %s84, %s100
      %p102 = scmp.eq.s32.totalorder %s23, 0
      %p103 = por %p101, %p102
      %s104 = ssub.s32 %s24, %s43
      %s105 = ssub.s32 %s25, %s39
      %s106 = sor.u32 %s104, %s105
      %p107 = scmp.eq.s32.totalorder %s106, 0
      %s109 = sadd.s32 %s108, 1
      %s110 = scalar_select %p107, %s108, %s109
      %p113 = pneg %p107
      %p114 = scmp.eq.s32.totalorder %s17, 1
      %p115 = por %p113, %p114
      %p116 = scmp.ne.s32.totalorder %s108, %s111
      %p117 = scmp.eq.s32.totalorder %s17, 0
      %p118 = por %p116, %p117
      %p119 = scmp.ne.s32.totalorder %s108, %s111
      %p120 = scmp.eq.s32.totalorder %s22, 1
      %p121 = por %p119, %p120
      %p122 = scmp.ne.s32.totalorder %s111, %s112
      %p123 = scmp.eq.s32.totalorder %s22, 0
      %p124 = por %p122, %p123
      %p125 = scmp.ne.s32.totalorder %s111, %s112
      %p126 = scmp.eq.s32.totalorder %s23, 1
      %p127 = por %p125, %p126
      %p129 = scmp.ne.s32.totalorder %s112, %s128
      %p130 = scmp.eq.s32.totalorder %s23, 0
      %p131 = por %p129, %p130
      %p132 = scmp.le.s32.totalorder 1, %s17
      %p133 = scmp.lt.s32.totalorder %s17, 3
      %p134 = pnand %p132, %p133
      %p135 = pneg %p134
      // Predicated region
      $region9: #{tpu_custom_call.1} parent=5 // pred_check
        _
      $region10: #{tpu_custom_call.1} parent=5 // pred_check_branch
        %137 = sbr.rel (%p134) target = $region12
      $region11: #{tpu_custom_call.1} parent=5 // pred_region
        %s138 = ssub.s32 %s17, 1
      $region12: #{tpu_custom_call.1} parent=5 // pred_fallthru
        _
      %p139 = scmp.lt.s32.totalorder %s17, 2
      // Predicated region
      $region13: #{tpu_custom_call.1} parent=5 // pred_check
        %p140 = pneg %p139
      $region14: #{tpu_custom_call.1} parent=5 // pred_check_branch
        %142 = sbr.rel (%p140) target = $region16
      $region15: #{tpu_custom_call.1} parent=5 // pred_region
        // Predicated region
        $region17: #{tpu_custom_call.1} parent=15 // pred_check
          %p143 = pneg %p60
        $region18: #{tpu_custom_call.1} parent=15 // pred_check_branch
          %145 = sbr.rel (%p143) target = $region20
        $region19: #{tpu_custom_call.1} parent=15 // pred_region
          %s146 = sand.u32 %s50, 1
          %s147 = scalar_lea.sflag [#allocation7], %s146
          %s148 = sand.u32 %s50, 1
          %s149 = smul.addr %s148, 8
          %s150 = scalar_lea.vmem [#allocation6], %s149
          %s151 = sadd.s32 %s25, %s26
          %s153 = ssub.s32 128, 128
          %154 = vsyncadd %s147, %s153
          %s155 = smul.addr %s24, 4
          %s156 = sadd.s32 %s151, %s155
          %s157 = smul.addr %s156, 32
          %s158 = scalar_lea.hbm %s0, %s157
          %s159 = sshll.u32 %s150, 4
          %s160 = int_to_ptr.vmem [resolvable:$true] %s159
          %165 = dma.hbm_to_vmem [thread:$0]  %s158, 128, %s160, %s147, 32, 32, 2
        $region20: #{tpu_custom_call.1} parent=15 // pred_fallthru
          _
        // Predicated region
        $region21: #{tpu_custom_call.1} parent=15 // pred_check
          %p166 = pneg %p90
        $region22: #{tpu_custom_call.1} parent=15 // pred_check_branch
          %168 = sbr.rel (%p166) target = $region24
        $region23: #{tpu_custom_call.1} parent=15 // pred_region
          %s169 = sand.u32 %s80, 1
          %s170 = scalar_lea.sflag [#allocation10], %s169
          %s171 = sand.u32 %s80, 1
          %s172 = smul.addr %s171, 2
          %s173 = scalar_lea.vmem [#allocation9], %s172
          %s174 = sadd.s32 %s25, %s26
          %s176 = ssub.s32 32, 32
          %177 = vsyncadd %s170, %s176
          %s178 = sadd.s32 %s174, %s24
          %s179 = smul.addr %s178, 32
          %s180 = scalar_lea.hbm %s1, %s179
          %s182 = sshll.u32 %s173, 4
          %s183 = int_to_ptr.vmem [resolvable:$true] %s182
          %185 = dma.hbm_to_vmem [thread:$0]  %s180, 32, %s183, %s170
        $region24: #{tpu_custom_call.1} parent=15 // pred_fallthru
          _
      $region16: #{tpu_custom_call.1} parent=5 // pred_fallthru
        _
      %p186 = scmp.le.s32.totalorder 1, %s17
      %p187 = scmp.lt.s32.totalorder %s17, 3
      %p188 = pnand %p186, %p187
      %p189 = pneg %p188
      // Predicated region
      $region25: #{tpu_custom_call.1} parent=5 // pred_check
        _
      $region26: #{tpu_custom_call.1} parent=5 // pred_check_branch
        %191 = sbr.rel (%p188) target = $region28
      $region27: #{tpu_custom_call.1} parent=5 // pred_region
        %s192 = ssub.s32 %s17, 1
        %s193 = sand.u32 %s53, 1
        %s194 = scalar_lea.sflag [#allocation7], %s193
        %s195 = sand.u32 %s53, 1
        %s196 = smul.addr %s195, 8
        %s197 = scalar_lea.vmem [#allocation6], %s196
        // Predicated region
        $region29: #{tpu_custom_call.1} parent=27 // pred_check
          %p198 = pneg %p66
        $region30: #{tpu_custom_call.1} parent=27 // pred_check_branch
          %200 = sbr.rel (%p198) target = $region32
        $region31: #{tpu_custom_call.1} parent=27 // pred_region
          %201 = dma.done %s194, 128
        $region32: #{tpu_custom_call.1} parent=27 // pred_fallthru
          _
        %s202 = sand.u32 %s83, 1
        %s203 = scalar_lea.sflag [#allocation10], %s202
        %s204 = sand.u32 %s83, 1
        %s205 = smul.addr %s204, 2
        %s206 = scalar_lea.vmem [#allocation9], %s205
        // Predicated region
        $region33: #{tpu_custom_call.1} parent=27 // pred_check
          %p207 = pneg %p96
        $region34: #{tpu_custom_call.1} parent=27 // pred_check_branch
          %209 = sbr.rel (%p207) target = $region36
        $region35: #{tpu_custom_call.1} parent=27 // pred_region
          %210 = dma.done %s203, 32
        $region36: #{tpu_custom_call.1} parent=27 // pred_fallthru
          _
        %s211 = sand.u32 %s53, 1
        %s212 = scalar_lea.sflag [#allocation7], %s211
        %s213 = sand.u32 %s53, 1
        %s214 = smul.addr %s213, 8
        %s215 = scalar_lea.vmem [#allocation6], %s214
        %p216 = pneg %p66
        %p217 = pneg %p63
        %s218 = sand.u32 %s83, 1
        %s219 = scalar_lea.sflag [#allocation10], %s218
        %s220 = sand.u32 %s83, 1
        %s221 = smul.addr %s220, 2
        %s222 = scalar_lea.vmem [#allocation9], %s221
        %p223 = pneg %p96
        %p224 = pneg %p93
        %p225 = pneg %p124
        %p226 = pneg %p121
        %s227 = sand.u32 %s111, 1
        %s228 = scalar_lea.sflag [#allocation8], %s227
        %s229 = sand.u32 %s111, 1
        %s230 = smul.addr %s229, 32
        %s231 = scalar_lea.vmem [#allocation11], %s230
        %s232 = sadd.s32 %s28, %s29
        %s233 = sadd.s32 %s28, %s29
        %p234 = scmp.eq.s32.totalorder %s29, 0
        // Predicated region
        $region37: #{tpu_custom_call.1} parent=27 // pred_check
          %p235 = pneg %p234
        $region38: #{tpu_custom_call.1} parent=27 // pred_check_branch
          %237 = sbr.rel (%p235) target = $region40
        $region39: #{tpu_custom_call.1} parent=27 // pred_region
          %238 = vst [vmem:[#allocation2] sm:$0x3] 0.0
          %239 = vst [vmem:[#allocation2 + $0x2] sm:$0x3] 0.0
          %240 = vst [vmem:[#allocation2 + $0x4] sm:$0x3] 0.0
          %241 = vst [vmem:[#allocation2 + $0x6] sm:$0x3] 0.0
          %242 = vst [vmem:[#allocation3] sm:$0x3] 0.0
          %243 = vst [vmem:[#allocation3 + $0x2] sm:$0x3] 0.0
          %244 = vst [vmem:[#allocation3 + $0x4] sm:$0x3] 0.0
          %245 = vst [vmem:[#allocation3 + $0x6] sm:$0x3] 0.0
          %246 = vst [vmem:[#allocation4] sm:$0x3] 0.0
          %247 = vst [vmem:[#allocation4 + $0x2] sm:$0x3] 0.0
          %248 = vst [vmem:[#allocation4 + $0x4] sm:$0x3] 0.0
          %249 = vst [vmem:[#allocation4 + $0x6] sm:$0x3] 0.0
          %250 = vst [vmem:[#allocation5] sm:$0x3] 0.0
          %251 = vst [vmem:[#allocation5 + $0x2] sm:$0x3] 0.0
          %252 = vst [vmem:[#allocation5 + $0x4] sm:$0x3] 0.0
          %253 = vst [vmem:[#allocation5 + $0x6] sm:$0x3] 0.0
        $region40: #{tpu_custom_call.1} parent=27 // pred_fallthru
          _
        %v254 = vld [vmem:[%s197] sm:$0x3]
        %v255 = vld [vmem:[%s197 + $0x2] sm:$0x3]
        %v256 = vld [vmem:[%s197 + $0x4] sm:$0x3]
        %v257 = vld [vmem:[%s197 + $0x6] sm:$0x3]
        %v258 = vld [vmem:[%s206] sm:$0x3]
        %vm259 = vcmask 1041408
        %v260 = vsel %vm259, %v254, -inf
        %v261 = vsel %vm259, %v255, -inf
        %v262 = vsel %vm259, %v256, -inf
        %v263 = vsel %vm259, %v257, -inf
        %v264 = vmax.f32 %v260, %v261
        %v265 = vmax.f32 %v262, %v263
        %v266 = vmax.f32 %v264, %v265
        %v267 = vsub.f32 %v254, %v266
        %v268 = vsub.f32 %v255, %v266
        %v269 = vsub.f32 %v256, %v266
        %v270 = vsub.f32 %v257, %v266
        %v271 = vmul.f32 %v267, 1.442695
        %v272 = vpow.pop %v271
        %v273 = vmul.f32 %v268, 1.442695
        %v274 = vpow.pop %v273
        %v275 = vmul.f32 %v269, 1.442695
        %v276 = vpow.pop %v275
        %v277 = vmul.f32 %v270, 1.442695
        %v278 = vpow.pop %v277
        %v279 = vsel %vm259, %v272, 0.0
        %v280 = vsel %vm259, %v274, 0.0
        %v281 = vadd.f32 %v279, %v280
        %v282 = vsel %vm259, %v276, 0.0
        %v283 = vadd.f32 %v281, %v282
        %v284 = vsel %vm259, %v278, 0.0
        %v285 = vadd.f32 %v283, %v284
        %v286 = vrcp.pop %v285
        %v287 = vmul.f32 %v272, %v286
        %v288 = vmul.f32 %v274, %v286
        %v289 = vmul.f32 %v276, %v286
        %v290 = vmul.f32 %v278, %v286
        %v291 = vlog2.pop %v285
        %v292 = vmul.f32 %v291, 0.6931472
        %v293 = vadd.f32 %v266, %v292
        %vm294 = vcmp.eq.s32.totalorder %v258, 0
        %vm295 = vcmp.eq.s32.totalorder %v258, 1
        %vm296 = vcmp.eq.s32.totalorder %v258, 2
        %vm297 = vcmp.eq.s32.totalorder %v258, 3
        %v298 = vsel %vm294, 1, 0
        %v299 = vsel %vm295, 1, 0
        %v300 = vsel %vm296, 1, 0
        %v301 = vsel %vm297, 1, 0
        %v302 = vcvt.s32.f32 %v298
        %v303 = vcvt.s32.f32 %v299
        %v304 = vcvt.s32.f32 %v300
        %v305 = vcvt.s32.f32 %v301
        %v306 = vld [vmem:[#allocation2] sm:$0x3]
        %v307 = vld [vmem:[#allocation2 + $0x2] sm:$0x3]
        %v308 = vld [vmem:[#allocation2 + $0x4] sm:$0x3]
        %v309 = vld [vmem:[#allocation2 + $0x6] sm:$0x3]
        %v310 = vmul.f32 %v287, %v302
        %v311 = vmul.f32 %v288, %v303
        %v312 = vmul.f32 %v289, %v304
        %v313 = vmul.f32 %v290, %v305
        %v314 = vadd.f32 %v306, %v310
        %v315 = vadd.f32 %v307, %v311
        %v316 = vadd.f32 %v308, %v312
        %v317 = vadd.f32 %v309, %v313
        %318 = vst [vmem:[#allocation2] sm:$0x3] %v314
        %319 = vst [vmem:[#allocation2 + $0x2] sm:$0x3] %v315
        %320 = vst [vmem:[#allocation2 + $0x4] sm:$0x3] %v316
        %321 = vst [vmem:[#allocation2 + $0x6] sm:$0x3] %v317
        %v322 = vld [vmem:[#allocation3] sm:$0x3]
        %v323 = vld [vmem:[#allocation3 + $0x2] sm:$0x3]
        %v324 = vld [vmem:[#allocation3 + $0x4] sm:$0x3]
        %v325 = vld [vmem:[#allocation3 + $0x6] sm:$0x3]
        %v326 = vadd.f32 %v322, %v287
        %v327 = vadd.f32 %v323, %v288
        %v328 = vadd.f32 %v324, %v289
        %v329 = vadd.f32 %v325, %v290
        %330 = vst [vmem:[#allocation3] sm:$0x3] %v326
        %331 = vst [vmem:[#allocation3 + $0x2] sm:$0x3] %v327
        %332 = vst [vmem:[#allocation3 + $0x4] sm:$0x3] %v328
        %333 = vst [vmem:[#allocation3 + $0x6] sm:$0x3] %v329
        %v334 = vld [vmem:[#allocation4] sm:$0x3]
        %v335 = vld [vmem:[#allocation4 + $0x2] sm:$0x3]
        %v336 = vld [vmem:[#allocation4 + $0x4] sm:$0x3]
        %v337 = vld [vmem:[#allocation4 + $0x6] sm:$0x3]
        %v338 = vadd.f32 %v334, %v302
        %v339 = vadd.f32 %v335, %v303
        %v340 = vadd.f32 %v336, %v304
        %v341 = vadd.f32 %v337, %v305
        %342 = vst [vmem:[#allocation4] sm:$0x3] %v338
        %343 = vst [vmem:[#allocation4 + $0x2] sm:$0x3] %v339
        %344 = vst [vmem:[#allocation4 + $0x4] sm:$0x3] %v340
        %345 = vst [vmem:[#allocation4 + $0x6] sm:$0x3] %v341
        %v346 = vld [vmem:[#allocation5] sm:$0x3]
        %v347 = vld [vmem:[#allocation5 + $0x2] sm:$0x3]
        %v348 = vld [vmem:[#allocation5 + $0x4] sm:$0x3]
        %v349 = vld [vmem:[#allocation5 + $0x6] sm:$0x3]
        %v350 = vsub.f32 %v293, %v254
        %v351 = vsub.f32 %v293, %v255
        %v352 = vsub.f32 %v293, %v256
        %v353 = vsub.f32 %v293, %v257
        %v354 = vmul.f32 %v302, %v350
        %v355 = vmul.f32 %v303, %v351
        %v356 = vmul.f32 %v304, %v352
        %v357 = vmul.f32 %v305, %v353
        %v358 = vadd.f32 %v346, %v354
        %v359 = vadd.f32 %v347, %v355
        %v360 = vadd.f32 %v348, %v356
        %v361 = vadd.f32 %v349, %v357
        %362 = vst [vmem:[#allocation5] sm:$0x3] %v358
        %363 = vst [vmem:[#allocation5 + $0x2] sm:$0x3] %v359
        %364 = vst [vmem:[#allocation5 + $0x4] sm:$0x3] %v360
        %365 = vst [vmem:[#allocation5 + $0x6] sm:$0x3] %v361
        // Predicated region
        $region41: #{tpu_custom_call.1} parent=27 // pred_check
          %p366 = pneg %p234
        $region42: #{tpu_custom_call.1} parent=27 // pred_check_branch
          %368 = sbr.rel (%p366) target = $region44
        $region43: #{tpu_custom_call.1} parent=27 // pred_region
          %v369 = vld [vmem:[#allocation2] sm:$0x3]
          %v370 = vld [vmem:[#allocation2 + $0x2] sm:$0x3]
          %v371 = vld [vmem:[#allocation2 + $0x4] sm:$0x3]
          %v372 = vld [vmem:[#allocation2 + $0x6] sm:$0x3]
          %v373 = vsel %vm259, %v369, 0.0
          %v374 = vrot.slane %v373, 4
          %v375 = vadd.f32 %v373, %v374
          %v376 = vrot.slane %v375, 2
          %v377 = vadd.f32 %v375, %v376
          %v378 = vrot.slane %v377, 1
          %v379 = vadd.f32 %v377, %v378
          %v380 = vsel %vm259, %v370, 0.0
          %v381 = vrot.slane %v380, 4
          %v382 = vadd.f32 %v380, %v381
          %v383 = vrot.slane %v382, 2
          %v384 = vadd.f32 %v382, %v383
          %v385 = vrot.slane %v384, 1
          %v386 = vadd.f32 %v384, %v385
          %v387 = vsel %vm259, %v371, 0.0
          %v388 = vrot.slane %v387, 4
          %v389 = vadd.f32 %v387, %v388
          %v390 = vrot.slane %v389, 2
          %v391 = vadd.f32 %v389, %v390
          %v392 = vrot.slane %v391, 1
          %v393 = vadd.f32 %v391, %v392
          %v394 = vsel %vm259, %v372, 0.0
          %v395 = vrot.slane %v394, 4
          %v396 = vadd.f32 %v394, %v395
          %v397 = vrot.slane %v396, 2
          %v398 = vadd.f32 %v396, %v397
          %v399 = vrot.slane %v398, 1
          %v400 = vadd.f32 %v398, %v399
          %vm405 = vcmask 1041409
          %v406 = vsel %vm405, %v386, %v379
          %vm407 = vcmask 1042434
          %v408 = vsel %vm407, %v393, %v406
          %vm409 = vcmask 1043459
          %v410 = vsel %vm409, %v400, %v408
          %412 = vst [vmem:[%s231] sm:$0xf] %v410
          %v413 = vld [vmem:[#allocation3] sm:$0x3]
          %v414 = vld [vmem:[#allocation3 + $0x2] sm:$0x3]
          %v415 = vld [vmem:[#allocation3 + $0x4] sm:$0x3]
          %v416 = vld [vmem:[#allocation3 + $0x6] sm:$0x3]
          %v417 = vsel %vm259, %v413, 0.0
          %v418 = vrot.slane %v417, 4
          %v419 = vadd.f32 %v417, %v418
          %v420 = vrot.slane %v419, 2
          %v421 = vadd.f32 %v419, %v420
          %v422 = vrot.slane %v421, 1
          %v423 = vadd.f32 %v421, %v422
          %v424 = vsel %vm259, %v414, 0.0
          %v425 = vrot.slane %v424, 4
          %v426 = vadd.f32 %v424, %v425
          %v427 = vrot.slane %v426, 2
          %v428 = vadd.f32 %v426, %v427
          %v429 = vrot.slane %v428, 1
          %v430 = vadd.f32 %v428, %v429
          %v431 = vsel %vm259, %v415, 0.0
          %v432 = vrot.slane %v431, 4
          %v433 = vadd.f32 %v431, %v432
          %v434 = vrot.slane %v433, 2
          %v435 = vadd.f32 %v433, %v434
          %v436 = vrot.slane %v435, 1
          %v437 = vadd.f32 %v435, %v436
          %v438 = vsel %vm259, %v416, 0.0
          %v439 = vrot.slane %v438, 4
          %v440 = vadd.f32 %v438, %v439
          %v441 = vrot.slane %v440, 2
          %v442 = vadd.f32 %v440, %v441
          %v443 = vrot.slane %v442, 1
          %v444 = vadd.f32 %v442, %v443
          %v449 = vsel %vm405, %v430, %v423
          %v450 = vsel %vm407, %v437, %v449
          %v451 = vsel %vm409, %v444, %v450
          %453 = vst [vmem:[%s231 + $0x8] sm:$0xf] %v451
          %v454 = vld [vmem:[#allocation4] sm:$0x3]
          %v455 = vld [vmem:[#allocation4 + $0x2] sm:$0x3]
          %v456 = vld [vmem:[#allocation4 + $0x4] sm:$0x3]
          %v457 = vld [vmem:[#allocation4 + $0x6] sm:$0x3]
          %v458 = vsel %vm259, %v454, 0.0
          %v459 = vrot.slane %v458, 4
          %v460 = vadd.f32 %v458, %v459
          %v461 = vrot.slane %v460, 2
          %v462 = vadd.f32 %v460, %v461
          %v463 = vrot.slane %v462, 1
          %v464 = vadd.f32 %v462, %v463
          %v465 = vsel %vm259, %v455, 0.0
          %v466 = vrot.slane %v465, 4
          %v467 = vadd.f32 %v465, %v466
          %v468 = vrot.slane %v467, 2
          %v469 = vadd.f32 %v467, %v468
          %v470 = vrot.slane %v469, 1
          %v471 = vadd.f32 %v469, %v470
          %v472 = vsel %vm259, %v456, 0.0
          %v473 = vrot.slane %v472, 4
          %v474 = vadd.f32 %v472, %v473
          %v475 = vrot.slane %v474, 2
          %v476 = vadd.f32 %v474, %v475
          %v477 = vrot.slane %v476, 1
          %v478 = vadd.f32 %v476, %v477
          %v479 = vsel %vm259, %v457, 0.0
          %v480 = vrot.slane %v479, 4
          %v481 = vadd.f32 %v479, %v480
          %v482 = vrot.slane %v481, 2
          %v483 = vadd.f32 %v481, %v482
          %v484 = vrot.slane %v483, 1
          %v485 = vadd.f32 %v483, %v484
          %v490 = vsel %vm405, %v471, %v464
          %v491 = vsel %vm407, %v478, %v490
          %v492 = vsel %vm409, %v485, %v491
          %494 = vst [vmem:[%s231 + $0x10] sm:$0xf] %v492
          %v495 = vld [vmem:[#allocation5] sm:$0x3]
          %v496 = vld [vmem:[#allocation5 + $0x2] sm:$0x3]
          %v497 = vld [vmem:[#allocation5 + $0x4] sm:$0x3]
          %v498 = vld [vmem:[#allocation5 + $0x6] sm:$0x3]
          %v499 = vsel %vm259, %v495, 0.0
          %v500 = vrot.slane %v499, 4
          %v501 = vadd.f32 %v499, %v500
          %v502 = vrot.slane %v501, 2
          %v503 = vadd.f32 %v501, %v502
          %v504 = vrot.slane %v503, 1
          %v505 = vadd.f32 %v503, %v504
          %v506 = vsel %vm259, %v496, 0.0
          %v507 = vrot.slane %v506, 4
          %v508 = vadd.f32 %v506, %v507
          %v509 = vrot.slane %v508, 2
          %v510 = vadd.f32 %v508, %v509
          %v511 = vrot.slane %v510, 1
          %v512 = vadd.f32 %v510, %v511
          %v513 = vsel %vm259, %v497, 0.0
          %v514 = vrot.slane %v513, 4
          %v515 = vadd.f32 %v513, %v514
          %v516 = vrot.slane %v515, 2
          %v517 = vadd.f32 %v515, %v516
          %v518 = vrot.slane %v517, 1
          %v519 = vadd.f32 %v517, %v518
          %v520 = vsel %vm259, %v498, 0.0
          %v521 = vrot.slane %v520, 4
          %v522 = vadd.f32 %v520, %v521
          %v523 = vrot.slane %v522, 2
          %v524 = vadd.f32 %v522, %v523
          %v525 = vrot.slane %v524, 1
          %v526 = vadd.f32 %v524, %v525
          %v531 = vsel %vm405, %v512, %v505
          %v532 = vsel %vm407, %v519, %v531
          %v533 = vsel %vm409, %v526, %v532
          %535 = vst [vmem:[%s231 + $0x18] sm:$0xf] %v533
        $region44: #{tpu_custom_call.1} parent=27 // pred_fallthru
          _
        %s536 = sand.u32 %s111, 1
        %s537 = scalar_lea.sflag [#allocation8], %s536
        %s538 = sand.u32 %s111, 1
        %s539 = smul.addr %s538, 32
        %s540 = scalar_lea.vmem [#allocation11], %s539
        // Predicated region
        $region45: #{tpu_custom_call.1} parent=27 // pred_check
          %p541 = pneg %p121
        $region46: #{tpu_custom_call.1} parent=27 // pred_check_branch
          %543 = sbr.rel (%p541) target = $region48
        $region47: #{tpu_custom_call.1} parent=27 // pred_region
          %s545 = ssub.s32 512, 512
          %546 = vsyncadd %s537, %s545
          %s547 = smul.addr %s28, 4
          %s548 = smul.addr %s27, 4
          %s549 = sadd.s32 %s547, %s548
          %s550 = smul.addr %s549, 128
          %s551 = scalar_lea.hbm %s2, %s550
          %s552 = sshll.u32 %s540, 4
          %s553 = int_to_ptr.vmem [resolvable:$true] %s552
          %558 = dma.vmem_to_hbm [thread:$0]  %s553, 512, %s551, %s537, 128, 128, 8
        $region48: #{tpu_custom_call.1} parent=27 // pred_fallthru
          _
      $region28: #{tpu_custom_call.1} parent=5 // pred_fallthru
        _
      %p559 = scmp.le.s32.totalorder 2, %s17
      // Predicated region
      $region49: #{tpu_custom_call.1} parent=5 // pred_check
        %p560 = pneg %p559
      $region50: #{tpu_custom_call.1} parent=5 // pred_check_branch
        %562 = sbr.rel (%p560) target = $region52
      $region51: #{tpu_custom_call.1} parent=5 // pred_region
        %s563 = ssub.s32 %s17, 2
        // Predicated region
        $region53: #{tpu_custom_call.1} parent=51 // pred_check
          %p564 = pneg %p127
        $region54: #{tpu_custom_call.1} parent=51 // pred_check_branch
          %566 = sbr.rel (%p564) target = $region56
        $region55: #{tpu_custom_call.1} parent=51 // pred_region
          %s567 = sand.u32 %s112, 1
          %s568 = scalar_lea.sflag [#allocation8], %s567
          %s569 = sand.u32 %s112, 1
          %s570 = smul.addr %s569, 32
          %s571 = scalar_lea.vmem [#allocation11], %s570
          %572 = dma.done %s568, 512
        $region56: #{tpu_custom_call.1} parent=51 // pred_fallthru
          _
      $region52: #{tpu_custom_call.1} parent=5 // pred_fallthru
        _
    $region6: #{tpu_custom_call.1} parent=1 // loop_footer
      %s21 = sadd.s32 1, %s17
    $region7: #{tpu_custom_call.1} parent=1 // loop_footer_branch
      %16 = sbr.rel target = $region3
    $region8: #{tpu_custom_call.1} parent=1 // loop_exit
      _
    %573 = vsyncpa [#allocation7], 1
    %s574 = scalar_lea.sflag [#allocation7], 1
    %575 = vsyncpa %s574, 1
    %576 = vsyncpa [#allocation10], 1
    %s577 = scalar_lea.sflag [#allocation10], 1
    %578 = vsyncpa %s577, 1
    %579 = vsyncpa [#allocation8], 1
    %s580 = scalar_lea.sflag [#allocation8], 1
    %581 = vsyncpa %s580, 1

</llo_original>
